<compile_context>
chip_gen: v7x
topology: tpu7x:2x2x1
jax: 0.10.0
libtpu: 0.0.40
codegen_flags: <defaults>
</compile_context>

<pallas_src>
import math

import numpy as np
import jax
import jax.numpy as jnp
from jax.experimental import pallas as pl
from jax.experimental.pallas import tpu as pltpu


def _cdiv(a, b):
    return (a + b - 1) // b


def _round_up(x, m):
    return ((x + m - 1) // m) * m


def _vmem_capacity_bytes():
    # Generation-aware: 128 MiB on v5e/v6e, 64 MiB per TensorCore on v7x.
    try:
        return int(pltpu.get_tpu_info().vmem_capacity_bytes)
    except Exception:
        return 64 << 20  # conservative fallback (v7x per-TC VMEM)


# ----------------------------------------------------------------------------
# Pallas kernel: channel-mixing matmul, NCHW-native, bn images per grid step.
#   x_ref: (bn, Cin, t_hw)   w_ref: (Cout, Cin)   o_ref: (bn, Cout, t_hw)
# ----------------------------------------------------------------------------
def _make_channel_mix_kernel(bn):
    def kernel(x_ref, w_ref, o_ref):
        w = w_ref[...]
        # Static unrolled loop over the batch block (bn is a trace-time const).
        for b in range(bn):
            o_ref[b] = jnp.dot(
                w, x_ref[b], preferred_element_type=jnp.float32
            ).astype(o_ref.dtype)
        # NOTE: an elementwise epilogue (bias/BN/ReLU/residual) could be fused
        # here essentially for free (spare VALU/EUP slots under the DMA-bound
        # schedule); the Fusion module has no such consumer, so none is added.
    return kernel


def conv1x1_pallas(x_nchw, weight_oi, io_dtype=None):
    """1x1 conv, no bias, stride 1, pad 0 (== F.conv2d with an (O,I,1,1) kernel).

    x_nchw:    (N, Cin, H, W)
    weight_oi: (Cout, Cin)
    io_dtype:  optional I/O dtype (e.g. jnp.bfloat16) to halve HBM traffic;
               accumulation stays f32.  Default: keep the input dtype (f32).
    returns    (N, Cout, H, W) in the I/O dtype.
    """
    N, Cin, H, W = (int(d) for d in x_nchw.shape)
    Cout = int(weight_oi.shape[0])
    HW = H * W

    if io_dtype is not None:
        x_nchw = x_nchw.astype(io_dtype)
        weight_oi = weight_oi.astype(io_dtype)

    # NCHW-native view: (N, Cin, HW).  Contiguous reshape -> no data movement.
    x3d = x_nchw.reshape(N, Cin, HW)
    w = weight_oi
    itemsize = np.dtype(x3d.dtype).itemsize

    # ---- VMEM budget (generation-aware) -------------------------------------
    vmem_cap = _vmem_capacity_bytes()
    total_budget = min((vmem_cap * 3) // 4, 96 << 20)

    weight_bytes = Cout * Cin * itemsize
    weight_single_buffer = weight_bytes > (2 << 20)  # only worth it when large
    weight_resident = weight_bytes * (1 if weight_single_buffer else 2)
    headroom = 4 << 20
    tile_budget = max(total_budget - weight_resident - headroom, 4 << 20)

    # Double-buffered input + output tile bytes per lane column (bn = 1).
    per_col = 2 * (Cin + Cout) * itemsize
    t_hw_max = (tile_budget // per_col) // 128 * 128
    t_hw_max = int(max(128, min(16384, t_hw_max)))

    if HW > t_hw_max:
        # Regime A: tile over HW; one image per grid step.
        bn, t_hw = 1, t_hw_max
        n_hw = _cdiv(HW, t_hw)  # partial last block masked (no HW reduction)
        n_b = N
    else:
        # Regime B: whole HW per step; block multiple images per grid step so
        # each DMA is one contiguous bn*Cin*HW slab (amortizes ~0.35us/step).
        t_hw, n_hw = HW, 1
        per_img = 2 * (Cin + Cout) * HW * itemsize
        bn = int(max(1, tile_budget // per_img))
        bn = min(bn, N)
        if N >= 2:
            # Keep at least 2 grid steps so v7x's second TensorCore gets work.
            bn = min(bn, _cdiv(N, 2))
        n_b = _cdiv(N, bn)
        if n_b * n_hw == 1 and HW >= 256:
            # N == 1 and a single block: split HW in half for megacore.
            t_hw = _round_up(_cdiv(HW, 2), 128)
            n_hw = _cdiv(HW, t_hw)

    bn, t_hw, n_b, n_hw = int(bn), int(t_hw), int(n_b), int(n_hw)

    footprint = (2 * bn * (Cin + Cout) * t_hw * itemsize
                 + weight_resident + headroom)
    vmem_limit = int(min(max(footprint, 32 << 20), vmem_cap))

    w_spec_kwargs = {}
    if weight_single_buffer:
        # Block index never changes -> double-buffering the weight buys nothing
        # and wastes VMEM; single-buffer it when it is large.
        w_spec_kwargs["pipeline_mode"] = pl.Buffered(1)

    out3d = pl.pallas_call(
        _make_channel_mix_kernel(bn),
        out_shape=jax.ShapeDtypeStruct((N, Cout, HW), x3d.dtype),
        grid=(n_b, n_hw),
        in_specs=[
            # pixels: contiguous (bn, Cin, t_hw) slab, lane-dense last dim
            pl.BlockSpec((bn, Cin, t_hw), lambda i, j: (i, 0, j)),
            # full weight, same block every step (stays resident)
            pl.BlockSpec((Cout, Cin), lambda i, j: (0, 0), **w_spec_kwargs),
        ],
        out_specs=pl.BlockSpec((bn, Cout, t_hw), lambda i, j: (i, 0, j)),
        compiler_params=pltpu.CompilerParams(
            dimension_semantics=("parallel", "parallel"),
            vmem_limit_bytes=vmem_limit,
        ),
        cost_estimate=pl.CostEstimate(
            flops=2 * N * HW * Cin * Cout,
            transcendentals=0,
            bytes_accessed=itemsize * (N * Cin * HW + N * Cout * HW + Cin * Cout),
        ),
    )(x3d, w)

    return out3d.reshape(N, Cout, H, W)


# ----------------------------------------------------------------------------
# Butterfly graph structure (faithful port of Butterfly_general_matrix.__init__)
# ----------------------------------------------------------------------------
def make_cir_cplex(in_channels, out_channels, power, log_n, n):
    cir = np.zeros((log_n, out_channels, in_channels), dtype=np.int32)
    for idx in range(log_n):
        for i in range(in_channels):
            for j in range(out_channels):
                kth_pow = (1 << power * (idx + 1)) - (1 << power * idx)
                # Matches the original Python operator precedence:
                #   n & kth_pow >> m*k  ==  n & (kth_pow >> (m*k))
                j_idx_digit = j & (kth_pow >> (power * idx))
                part_1 = (1 << (log_n - idx) * power) - 1
                part_2 = (1 << log_n * power) - (1 << (log_n - idx) * power)
                ji_mixture = (part_1 & i) + (part_2 & j)
                cir[idx, j, i] = idx * (1 << power) * n + j_idx_digit * n + ji_mixture
    return jnp.asarray(cir)


class ButterflyGeneralMatrix:
    """JAX port of Butterfly_general_matrix (1x1 conv with butterfly weight)."""

    def __init__(self, in_channels, out_channels, key, butterfly_K=4,
                 residual_method="no_residual", fan_degree=0):
        self.in_channels = in_channels
        self.out_channels = out_channels
        self.residual_method = residual_method

        n = max(in_channels, out_channels)
        # Natural log, faithful to the original code; only valid for
        # butterfly_K in {2, 4, 8} (the assert guards it).
        power = int(math.ceil(math.log(butterfly_K)))
        assert 1 << power == butterfly_K
        log_n = int(np.ceil(math.log(n, 1 << power)))

        if fan_degree == 0:
            fan_degree = in_channels
        stdv_all = math.sqrt(2.0 / fan_degree)
        stdv_mul = math.pow(2.0, (log_n - 1) / log_n) * math.pow(stdv_all, 1.0 / log_n)

        self.weight1 = jax.random.uniform(
            key, ((1 << power) * n * log_n,), dtype=jnp.float32,
            minval=-stdv_mul, maxval=stdv_mul)
        self.cir_cplex = make_cir_cplex(in_channels, out_channels, power, log_n, n)

        # Cache the effective weights once (gather + prod over log_n stages is
        # a handful of tiny XLA ops; recomputing every forward adds launch
        # latency that dominates for small images).
        self._w_raw = jnp.prod(self.weight1[self.cir_cplex], axis=0)  # (Cout, Cin)
        if self.residual_method == "residual_stoe":
            assert self.out_channels == self.in_channels
            self._w_call = self._w_raw + jnp.eye(self.in_channels, dtype=jnp.float32)
        else:
            self._w_call = self._w_raw

    def effective_weight(self):
        # prod_from_edges: (Cout, Cin), no residual folded.
        return self._w_raw

    def __call__(self, x):
        # Residual (if any) is already folded into the weight: (W+I)@x == W@x + x.
        return conv1x1_pallas(x, self._w_call)


class ButterflyTransform:
    """JAX port of ButterflyTransform (set of balanced BFTs), fully fused."""

    def __init__(self, in_channels, out_channels, key, butterfly_K=4):
        self.in_channels = in_channels
        self.out_channels = out_channels
        if in_channels <= out_channels:
            self.num_balanced_bfts = int(np.ceil(out_channels / in_channels))
            c = in_channels
        else:
            self.num_balanced_bfts = int(np.ceil(in_channels / out_channels))
            c = out_channels
        self._c = c
        keys = jax.random.split(key, self.num_balanced_bfts)
        self.balanced_bfts = [
            ButterflyGeneralMatrix(c, c, keys[i], butterfly_K=butterfly_K,
                                   residual_method="residual_stoe",
                                   fan_degree=out_channels)
            for i in range(self.num_balanced_bfts)
        ]
        # Fold all per-BFT (W_i + I) blocks into ONE effective weight so the
        # whole forward pass is a single channel-mix matmul; cached here.
        self._weight_fused = self._fused_weight()

    def _fused_weight(self):
        c = self._c
        eye = jnp.eye(c, dtype=jnp.float32)
        blocks = [b.effective_weight() + eye for b in self.balanced_bfts]  # (c, c)
        if self.in_channels <= self.out_channels:
            # cat(outputs, 1)[:, :out_channels] == concat weights along rows,
            # truncated to out_channels.
            return jnp.concatenate(blocks, axis=0)[: self.out_channels, :]
        else:
            # sum_i (W_i + I) @ x_slice_i == one matmul with weights concatenated
            # along columns; truncating columns to in_channels implements the
            # zero-padding of the last activation slice.
            return jnp.concatenate(blocks, axis=1)[:, : self.in_channels]

    def __call__(self, x):
        return conv1x1_pallas(x, self._weight_fused)


class Fusion:
    """JAX/Pallas port of the PyTorch `Fusion` module."""

    def __init__(self, in_channels, out_channels, fusion_method="conv2d",
                 key=jax.random.PRNGKey(0)):
        self.fusion_method = fusion_method
        if fusion_method == "conv2d":
            fan_in = in_channels  # 1x1 kernel
            bound = 1.0 / math.sqrt(fan_in)
            self.weight = jax.random.uniform(
                key, (out_channels, in_channels), dtype=jnp.float32,
                minval=-bound, maxval=bound)  # (O, I, 1, 1) squeezed
            self._conv = lambda x, io_dtype=None: conv1x1_pallas(
                x, self.weight, io_dtype=io_dtype)
        elif fusion_method == "butterfly":
            self._conv = ButterflyTransform(in_channels, out_channels, key)
        else:
            raise ValueError(fusion_method)

    def __call__(self, x):
        return self._conv(x)


# ----------------------------------------------------------------------------
# Demo / self-check
# ----------------------------------------------------------------------------
if __name__ == "__main__":
    key = jax.random.PRNGKey(0)
    kx, kx2, kc, kb, kb2 = jax.random.split(key, 5)

    N, H, W = 2, 16, 16

    # ---- fusion_method='conv2d' (module default), 16 -> 32 -----------------
    Cin, Cout = 16, 32
    x = jax.random.normal(kx, (N, Cin, H, W), dtype=jnp.float32)
    fusion_conv = Fusion(Cin, Cout, fusion_method="conv2d", key=kc)
    y_conv = jax.block_until_ready(fusion_conv(x))
    ref_conv = jnp.einsum("nchw,oc->nohw", x, fusion_conv.weight)
    assert y_conv.shape == (N, Cout, H, W)
    assert np.allclose(np.asarray(y_conv), np.asarray(ref_conv),
                       rtol=1e-4, atol=1e-4)

    # ---- optional bf16 I/O path (halves HBM bytes; looser numerics) --------
    y_bf16 = jax.block_until_ready(
        conv1x1_pallas(x, fusion_conv.weight, io_dtype=jnp.bfloat16))
    assert y_bf16.shape == (N, Cout, H, W)
    assert np.allclose(np.asarray(y_bf16, dtype=np.float32),
                       np.asarray(ref_conv), rtol=1e-1, atol=1e-1)

    # ---- fusion_method='butterfly', in <= out: 16 -> 32 ---------------------
    fusion_bft = Fusion(Cin, Cout, fusion_method="butterfly", key=kb)
    y_bft = jax.block_until_ready(fusion_bft(x))
    # unfused reference: per-BFT plain-JAX conv + residual, concat, slice
    refs = [jnp.einsum("nchw,oc->nohw", x, b.effective_weight()) + x
            for b in fusion_bft._conv.balanced_bfts]
    ref_bft = jnp.concatenate(refs, axis=1)[:, :Cout, :, :]
    assert y_bft.shape == (N, Cout, H, W)
    assert np.allclose(np.asarray(y_bft), np.asarray(ref_bft),
                       rtol=1e-4, atol=1e-4)

    # ---- fusion_method='butterfly', in > out (with channel padding): 20 -> 16
    Cin2, Cout2 = 20, 16
    x2 = jax.random.normal(kx2, (N, Cin2, H, W), dtype=jnp.float32)
    fusion_bft2 = Fusion(Cin2, Cout2, fusion_method="butterfly", key=kb2)
    y_bft2 = jax.block_until_ready(fusion_bft2(x2))
    # unfused reference: zero-padded slices, per-BFT conv + residual, accumulate
    ref2 = jnp.zeros((N, Cout2, H, W), dtype=jnp.float32)
    for i, b in enumerate(fusion_bft2._conv.balanced_bfts):
        cur = x2[:, i * Cout2:(i + 1) * Cout2, :, :]
        if cur.shape[1] < Cout2:
            pad = Cout2 - cur.shape[1]
            cur = jnp.concatenate(
                [cur, jnp.zeros((N, pad, H, W), dtype=x2.dtype)], axis=1)
        ref2 = ref2 + jnp.einsum("nchw,oc->nohw", cur, b.effective_weight()) + cur
    assert y_bft2.shape == (N, Cout2, H, W)
    assert np.allclose(np.asarray(y_bft2), np.asarray(ref2),
                       rtol=1e-4, atol=1e-4)

    print("KERNEL_OK")
</pallas_src>

<mosaic_0001>
module attributes {stable_mosaic.version = 11 : i64} {
  func.func @kernel(%arg0: i32, %arg1: i32, %arg2: memref<1x16x256xf32, #tpu.memory_space<vmem>>, %arg3: memref<32x16xf32, #tpu.memory_space<vmem>>, %arg4: memref<1x32x256xf32, #tpu.memory_space<vmem>>) attributes {dimension_semantics = [#tpu.dimension_semantics<parallel>, #tpu.dimension_semantics<parallel>], iteration_bounds = array<i64: 2, 1>, scalar_prefetch = 0 : i64, scratch_operands = 0 : i64, tpu.core_type = #tpu.core_type<tc>, window_params = [{transform_indices = @transform_0, window_bounds = array<i64: 1, 16, 256>}, {pipeline_mode = #tpu.pipeline_mode<synchronous>, transform_indices = @transform_1, window_bounds = array<i64: 32, 16>}, {transform_indices = @transform_2, window_bounds = array<i64: 1, 32, 256>}]} {
    %c0 = arith.constant 0 : index
    %c0_0 = arith.constant 0 : index
    %0 = vector.load %arg3[%c0, %c0_0] : memref<32x16xf32, #tpu.memory_space<vmem>>, vector<32x16xf32>
    %c0_1 = arith.constant 0 : index
    %c0_2 = arith.constant 0 : index
    %c0_3 = arith.constant 0 : index
    %1 = vector.load %arg2[%c0_1, %c0_2, %c0_3] : memref<1x16x256xf32, #tpu.memory_space<vmem>>, vector<1x16x256xf32>
    %2 = vector.shape_cast %1 : vector<1x16x256xf32> to vector<16x256xf32>
    %cst = arith.constant dense<0.000000e+00> : vector<32x256xf32>
    %3 = tpu.matmul %0, %2, %cst {dimension_numbers = #tpu.dot_dimension_numbers<[1], [0], [0], [1], [0, 0, 1, 1], [], []>} : vector<32x16xf32>, vector<16x256xf32>, vector<32x256xf32> -> vector<32x256xf32>
    %c0_4 = arith.constant 0 : index
    %c0_5 = arith.constant 0 : index
    %c0_6 = arith.constant 0 : index
    %4 = vector.load %arg4[%c0_4, %c0_5, %c0_6] : memref<1x32x256xf32, #tpu.memory_space<vmem>>, vector<1x32x256xf32>
    %5 = vector.shape_cast %4 : vector<1x32x256xf32> to vector<32x256xf32>
    %6 = vector.shape_cast %3 : vector<32x256xf32> to vector<1x32x256xf32>
    tpu.vector_store %arg4[%c0_4, %c0_5, %c0_6], %6 {strides = array<i32>} : memref<1x32x256xf32, #tpu.memory_space<vmem>>, vector<1x32x256xf32>,
    return
  }
  func.func @transform_0(%arg0: i32, %arg1: i32) -> (i32, i32, i32) {
    %c0_i32 = arith.constant 0 : i32
    %c0_i32_0 = arith.constant 0 : i32
    return %arg0, %c0_i32, %arg1 : i32, i32, i32
  }
  func.func @transform_1(%arg0: i32, %arg1: i32) -> (i32, i32) {
    %c0_i32 = arith.constant 0 : i32
    %c0_i32_0 = arith.constant 0 : i32
    %c0_i32_1 = arith.constant 0 : i32
    return %c0_i32, %c0_i32_0 : i32, i32
  }
  func.func @transform_2(%arg0: i32, %arg1: i32) -> (i32, i32, i32) {
    %c0_i32 = arith.constant 0 : i32
    %c0_i32_0 = arith.constant 0 : i32
    return %arg0, %c0_i32, %arg1 : i32, i32, i32
  }
}

</mosaic_0001>

<llo_original>
// kernel: tpu_custom_call.1
$region0: #{tpu_custom_call.1}
  #allocation0 [shape = 'u32[]', space=smem, size = 0x4, offset = 0x4, fixed_abs, tag = 'smem constant byte address 0x4 - core index']
  #allocation1 [shape = 'u32[144,128]{1,0:T(1,128)}', space=vmem, size = 0x12000, scoped, tag = 'internal scratch']
  %s0 = inlined_call_operand.hbm [shape: f32[2,16,256], index: 0, kind: input, shape index: {}]
  %s1 = inlined_call_operand.vmem [shape: f32[32,16], index: 1, kind: input, shape index: {}]
  %s2 = inlined_call_operand.hbm [shape: f32[2,32,256], index: 2, kind: output, shape index: {}]
  %s3 = sld [smem:[#allocation0]]
  $region45: #{tpu_custom_call.1} parent=0
    _
  %s5 = ssub.s32 1, %s3
  %s6 = scalar_select 0, %s5, %s3
  $region1: #{tpu_custom_call.1} parent=0
    #allocation2 [shape = 'u8[32768]{0}', space=vmem, size = 0x8000, scoped, tag = 'input window, operand 0']
    #allocation3 [shape = 's32[2]{0}', space=sflag, size = 0x8, scoped, tag = 'scoped memory for tpu_custom_call.1']
    #allocation4 [shape = 's32[2]{0}', space=sflag, size = 0x8, scoped, tag = 'scoped memory for tpu_custom_call.1']
    #allocation5 [shape = 'u8[65536]{0}', space=vmem, size = 0x10000, scoped, tag = 'output window, operand 0']
    %7 = vsyncpa [#allocation3], 0
    %s8 = scalar_lea.sflag [#allocation3], 1
    %9 = vsyncpa %s8, 0
    %10 = vsyncpa [#allocation4], 0
    %s11 = scalar_lea.sflag [#allocation4], 1
    %12 = vsyncpa %s11, 0
    loop: start=0, step=1, limit=4
    $region2: #{tpu_custom_call.1} parent=1 // loop_pre_header
      _
    $region3: #{tpu_custom_call.1} parent=1 // loop_header
      %s14 = sphi 0, %s18
      %p15 = scmp.ge.s32.totalorder %s14, 4
      %s21 = sphi 0, %s33
      %s22 = sphi 0, %s29
      %s23 = sphi 0, %s21
      %s24 = sphi 0, %s22
      %s25 = sphi 0, %s23
      %s26 = sphi 0, %s24
      %s38 = sphi 0, %s40
      %s41 = sphi 0, %s38
      %s42 = sphi 0, %s41
      %s58 = sphi 0, %s42
      %s62 = sphi 0, %s62
      %s64 = sphi 0, %s62
      %s65 = sphi 0, %s64
      %s79 = sphi 0, %s65
      %s87 = sphi 0, %s89
      %s90 = sphi 0, %s87
      %s91 = sphi 0, %s90
      %s107 = sphi 0, %s91
    $region4: #{tpu_custom_call.1} parent=1 // loop_header_branch
      %17 = sbr.rel (%p15) target = $region8
    $region5: #{tpu_custom_call.1} parent=1 // loop_body
      %s19 = ssub.s32 %s14, 1
      %s20 = ssub.s32 %s14, 2
      %s27 = sadd.s32 1, %s22
      %p28 = scmp.ge.s32.totalorder %s27, 1
      %s29 = scalar_select %p28, 0, %s27
      %s30 = sadd.s32 1, %s21
      %s31 = scalar_select %p28, %s30, %s21
      %p32 = scmp.ge.s32.totalorder %s31, 2
      %s33 = scalar_select %p32, 0, %s31
      %s34 = ssub.s32 %s21, %s33
      %s35 = ssub.s32 %s22, %s29
      %s36 = sor.u32 %s34, %s35
      %p37 = scmp.eq.s32.totalorder %s36, 0
      %s39 = sadd.s32 %s38, 1
      %s40 = scalar_select %p37, %s38, %s39
      %p43 = pneg %p37
      %p44 = scmp.eq.s32.totalorder %s14, 1
      %p45 = por %p43, %p44
      %p46 = scmp.ne.s32.totalorder %s38, %s41
      %p47 = scmp.eq.s32.totalorder %s14, 0
      %p48 = por %p46, %p47
      %p49 = scmp.ne.s32.totalorder %s38, %s41
      %p50 = scmp.eq.s32.totalorder %s19, 1
      %p51 = por %p49, %p50
      %p52 = scmp.ne.s32.totalorder %s41, %s42
      %p53 = scmp.eq.s32.totalorder %s19, 0
      %p54 = por %p52, %p53
      %p55 = scmp.ne.s32.totalorder %s41, %s42
      %p56 = scmp.eq.s32.totalorder %s20, 1
      %p57 = por %p55, %p56
      %p59 = scmp.ne.s32.totalorder %s42, %s58
      %p60 = scmp.eq.s32.totalorder %s20, 0
      %p61 = por %p59, %p60
      %s63 = sadd.s32 %s62, 1
      %p66 = scmp.eq.s32.totalorder %s14, 1
      %p67 = scmp.ne.s32.totalorder %s62, %s64
      %p68 = scmp.eq.s32.totalorder %s14, 0
      %p69 = por %p67, %p68
      %p70 = scmp.ne.s32.totalorder %s62, %s64
      %p71 = scmp.eq.s32.totalorder %s19, 1
      %p72 = por %p70, %p71
      %p73 = scmp.ne.s32.totalorder %s64, %s65
      %p74 = scmp.eq.s32.totalorder %s19, 0
      %p75 = por %p73, %p74
      %p76 = scmp.ne.s32.totalorder %s64, %s65
      %p77 = scmp.eq.s32.totalorder %s20, 1
      %p78 = por %p76, %p77
      %p80 = scmp.ne.s32.totalorder %s65, %s79
      %p81 = scmp.eq.s32.totalorder %s20, 0
      %p82 = por %p80, %p81
      %s83 = ssub.s32 %s21, %s33
      %s84 = ssub.s32 %s22, %s29
      %s85 = sor.u32 %s83, %s84
      %p86 = scmp.eq.s32.totalorder %s85, 0
      %s88 = sadd.s32 %s87, 1
      %s89 = scalar_select %p86, %s87, %s88
      %p92 = pneg %p86
      %p93 = scmp.eq.s32.totalorder %s14, 1
      %p94 = por %p92, %p93
      %p95 = scmp.ne.s32.totalorder %s87, %s90
      %p96 = scmp.eq.s32.totalorder %s14, 0
      %p97 = por %p95, %p96
      %p98 = scmp.ne.s32.totalorder %s87, %s90
      %p99 = scmp.eq.s32.totalorder %s19, 1
      %p100 = por %p98, %p99
      %p101 = scmp.ne.s32.totalorder %s90, %s91
      %p102 = scmp.eq.s32.totalorder %s19, 0
      %p103 = por %p101, %p102
      %p104 = scmp.ne.s32.totalorder %s90, %s91
      %p105 = scmp.eq.s32.totalorder %s20, 1
      %p106 = por %p104, %p105
      %p108 = scmp.ne.s32.totalorder %s91, %s107
      %p109 = scmp.eq.s32.totalorder %s20, 0
      %p110 = por %p108, %p109
      %p111 = scmp.le.s32.totalorder 1, %s14
      %p112 = scmp.lt.s32.totalorder %s14, 3
      %p113 = pnand %p111, %p112
      %p114 = pneg %p113
      // Predicated region
      $region9: #{tpu_custom_call.1} parent=5 // pred_check
        _
      $region10: #{tpu_custom_call.1} parent=5 // pred_check_branch
        %116 = sbr.rel (%p113) target = $region12
      $region11: #{tpu_custom_call.1} parent=5 // pred_region
        %s117 = ssub.s32 %s14, 1
        // Predicated region
        $region13: #{tpu_custom_call.1} parent=11 // pred_check
          %p118 = pneg %p75
        $region14: #{tpu_custom_call.1} parent=11 // pred_check_branch
          %120 = sbr.rel (%p118) target = $region16
        $region15: #{tpu_custom_call.1} parent=11 // pred_region
          _
        $region16: #{tpu_custom_call.1} parent=11 // pred_fallthru
          _
      $region12: #{tpu_custom_call.1} parent=5 // pred_fallthru
        _
      %p121 = scmp.lt.s32.totalorder %s14, 2
      // Predicated region
      $region17: #{tpu_custom_call.1} parent=5 // pred_check
        %p122 = pneg %p121
      $region18: #{tpu_custom_call.1} parent=5 // pred_check_branch
        %124 = sbr.rel (%p122) target = $region20
      $region19: #{tpu_custom_call.1} parent=5 // pred_region
        // Predicated region
        $region21: #{tpu_custom_call.1} parent=19 // pred_check
          %p125 = pneg %p48
        $region22: #{tpu_custom_call.1} parent=19 // pred_check_branch
          %127 = sbr.rel (%p125) target = $region24
        $region23: #{tpu_custom_call.1} parent=19 // pred_region
          %s128 = sand.u32 %s38, 1
          %s129 = scalar_lea.sflag [#allocation3], %s128
          %s130 = sand.u32 %s38, 1
          %s131 = smul.addr %s130, 32
          %s132 = scalar_lea.vmem [#allocation2], %s131
          %s133 = smul.u32 2, %s22
          %s135 = ssub.s32 512, 512
          %136 = vsyncadd %s129, %s135
          %s137 = smul.addr %s21, 4
          %s138 = sadd.s32 %s133, %s137
          %s139 = smul.addr %s138, 128
          %s140 = scalar_lea.hbm %s0, %s139
          %s141 = sshll.u32 %s132, 4
          %s142 = int_to_ptr.vmem [resolvable:$true] %s141
          %147 = dma.hbm_to_vmem [thread:$0]  %s140, 512, %s142, %s129, 256, 256, 16
        $region24: #{tpu_custom_call.1} parent=19 // pred_fallthru
          _
      $region20: #{tpu_custom_call.1} parent=5 // pred_fallthru
        _
      %p148 = scmp.le.s32.totalorder 1, %s14
      %p149 = scmp.lt.s32.totalorder %s14, 3
      %p150 = pnand %p148, %p149
      %p151 = pneg %p150
      // Predicated region
      $region25: #{tpu_custom_call.1} parent=5 // pred_check
        _
      $region26: #{tpu_custom_call.1} parent=5 // pred_check_branch
        %153 = sbr.rel (%p150) target = $region28
      $region27: #{tpu_custom_call.1} parent=5 // pred_region
        %s154 = ssub.s32 %s14, 1
        %s155 = sand.u32 %s41, 1
        %s156 = scalar_lea.sflag [#allocation3], %s155
        %s157 = sand.u32 %s41, 1
        %s158 = smul.addr %s157, 32
        %s159 = scalar_lea.vmem [#allocation2], %s158
        // Predicated region
        $region29: #{tpu_custom_call.1} parent=27 // pred_check
          %p160 = pneg %p54
        $region30: #{tpu_custom_call.1} parent=27 // pred_check_branch
          %162 = sbr.rel (%p160) target = $region32
        $region31: #{tpu_custom_call.1} parent=27 // pred_region
          %163 = dma.done %s156, 512
        $region32: #{tpu_custom_call.1} parent=27 // pred_fallthru
          _
        %s164 = sand.u32 %s41, 1
        %s165 = scalar_lea.sflag [#allocation3], %s164
        %s166 = sand.u32 %s41, 1
        %s167 = smul.addr %s166, 32
        %s168 = scalar_lea.vmem [#allocation2], %s167
        %p169 = pneg %p54
        %p170 = pneg %p51
        %p171 = pneg %p75
        %p172 = pneg %p72
        %p173 = pneg %p103
        %p174 = pneg %p100
        %s175 = sand.u32 %s90, 1
        %s176 = scalar_lea.sflag [#allocation4], %s175
        %s177 = sand.u32 %s90, 1
        %s178 = smul.addr %s177, 64
        %s179 = scalar_lea.vmem [#allocation5], %s178
        %s180 = smul.u32 2, %s24
        %s181 = smul.u32 2, %s24
        %v182 = vld [vmem:[%s1] sm:$0xff]
        %v183 = vld [vmem:[%s1 + $0x8] sm:$0xff]
        %v184 = vld [vmem:[%s1 + $0x10] sm:$0xff]
        %v185 = vld [vmem:[%s1 + $0x18] sm:$0xff]
        %v186 = vld [vmem:[%s159] sm:$0xff]
        %v187 = vld [vmem:[%s159 + $0x8] sm:$0xff]
        %v188 = vld [vmem:[%s159 + $0x10] sm:$0xff]
        %v189 = vld [vmem:[%s159 + $0x18] sm:$0xff]
        %vm190 = vcmask 130048
        %v192 = vsel %vm190, %v182, 0
        %v195 = vsel %vm190, %v183, 0
        %v198 = vsel %vm190, %v184, 0
        %v201 = vsel %vm190, %v185, 0
        %203 = vmatprep.subr.mxu0 %v187
        %204 = vmatpush1.msra.mxu0 %v186
        %205 = vmatprep.subr.mxu0 %v189
        %206 = vmatpush1.msra.mxu0 %v188
        %207 = vmatprep.subr.mxu0 0.0
        %208 = vmatpush1.msra.mxu0 0.0
        %209 = vmatprep.subr.mxu0 0.0
        %210 = vmatpush1.msra.mxu0 0.0
        %211 = vmatprep.subr.mxu0 0.0
        %212 = vmatpush1.msra.mxu0 0.0
        %213 = vmatprep.subr.mxu0 0.0
        %214 = vmatpush1.msra.mxu0 0.0
        %215 = vmatprep.subr.mxu0 0.0
        %216 = vmatpush1.msra.mxu0 0.0
        %217 = vmatprep.subr.mxu0 0.0
        %218 = vmatpush1.msra.mxu0 0.0
        %219 = vmatprep.subr.mxu0 0.0
        %220 = vmatpush1.msra.mxu0 0.0
        %221 = vmatprep.subr.mxu0 0.0
        %222 = vmatpush1.msra.mxu0 0.0
        %223 = vmatprep.subr.mxu0 0.0
        %224 = vmatpush1.msra.mxu0 0.0
        %225 = vmatprep.subr.mxu0 0.0
        %226 = vmatpush1.msra.mxu0 0.0
        %227 = vmatprep.subr.mxu0 0.0
        %228 = vmatpush1.msra.mxu0 0.0
        %229 = vmatprep.subr.mxu0 0.0
        %230 = vmatpush1.msra.mxu0 0.0
        %231 = vmatprep.subr.mxu0 0.0
        %232 = vmatpush1.msra.mxu0 0.0
        %233 = vmatprep.subr.mxu0 0.0
        %234 = vmatpush1.msra.mxu0 0.0
        %235 = vmatprep.subr.mxu0 0.0
        %236 = vmatpush1.msra.mxu0 0.0
        %237 = vmatprep.subr.mxu0 0.0
        %238 = vmatpush1.msra.mxu0 0.0
        %239 = vmatprep.subr.mxu0 0.0
        %240 = vmatpush1.msra.mxu0 0.0
        %241 = vmatprep.subr.mxu0 0.0
        %242 = vmatpush1.msra.mxu0 0.0
        %243 = vmatprep.subr.mxu0 0.0
        %244 = vmatpush1.msra.mxu0 0.0
        %245 = vmatprep.subr.mxu0 0.0
        %246 = vmatpush1.msra.mxu0 0.0
        %247 = vmatprep.subr.mxu0 0.0
        %248 = vmatpush1.msra.mxu0 0.0
        %249 = vmatprep.subr.mxu0 0.0
        %250 = vmatpush1.msra.mxu0 0.0
        %251 = vmatprep.subr.mxu0 0.0
        %252 = vmatpush1.msra.mxu0 0.0
        %253 = vmatprep.subr.mxu0 0.0
        %254 = vmatpush1.msra.mxu0 0.0
        %255 = vmatprep.subr.mxu0 0.0
        %256 = vmatpush1.msra.mxu0 0.0
        %257 = vmatprep.subr.mxu0 0.0
        %258 = vmatpush1.msra.mxu0 0.0
        %259 = vmatprep.subr.mxu0 0.0
        %260 = vmatpush1.msra.mxu0 0.0
        %261 = vmatprep.subr.mxu0 0.0
        %262 = vmatpush1.msra.mxu0 0.0
        %263 = vmatprep.subr.mxu0 0.0
        %264 = vmatpush1.msra.mxu0 0.0
        %265 = vmatprep.subr.mxu0 0.0
        %266 = vmatpush1.msra.mxu0 0.0
        %267 = vmatprep.mubr.f32.mxu0 0.0
        %268 = vmatmul.mubr.f32.gmra.mrb[0].mxu0 %v192
        %v269 = vpop.f32.mrb[0].mxu0
        %v270 = vadd.f32 0.0, %v269
        %v271 = vpop.f32.mrb[0].mxu0
        %v272 = vadd.f32 0.0, %v271
        %273 = vmatprep.mubr.f32.mxu0 0.0
        %274 = vmatmul.mubr.f32.gmra.mrb[0].mxu0 %v195
        %v275 = vpop.f32.mrb[0].mxu0
        %v276 = vadd.f32 0.0, %v275
        %v277 = vpop.f32.mrb[0].mxu0
        %v278 = vadd.f32 0.0, %v277
        %279 = vmatprep.mubr.f32.mxu0 0.0
        %280 = vmatmul.mubr.f32.gmra.mrb[0].mxu0 %v198
        %v281 = vpop.f32.mrb[0].mxu0
        %v282 = vadd.f32 0.0, %v281
        %v283 = vpop.f32.mrb[0].mxu0
        %v284 = vadd.f32 0.0, %v283
        %285 = vmatprep.mubr.f32.mxu0 0.0
        %286 = vmatmul.mubr.f32.gmra.mrb[0].mxu0 %v201
        %v287 = vpop.f32.mrb[0].mxu0
        %v288 = vadd.f32 0.0, %v287
        %v289 = vpop.f32.mrb[0].mxu0
        %v290 = vadd.f32 0.0, %v289
        %291 = vdwg.mxu0
        %292 = vst [vmem:[%s179] sm:$0xff] %v270
        %293 = vst [vmem:[%s179 + $0x8] sm:$0xff] %v272
        %294 = vst [vmem:[%s179 + $0x10] sm:$0xff] %v276
        %295 = vst [vmem:[%s179 + $0x18] sm:$0xff] %v278
        %296 = vst [vmem:[%s179 + $0x20] sm:$0xff] %v282
        %297 = vst [vmem:[%s179 + $0x28] sm:$0xff] %v284
        %298 = vst [vmem:[%s179 + $0x30] sm:$0xff] %v288
        %299 = vst [vmem:[%s179 + $0x38] sm:$0xff] %v290
        %s300 = sand.u32 %s90, 1
        %s301 = scalar_lea.sflag [#allocation4], %s300
        %s302 = sand.u32 %s90, 1
        %s303 = smul.addr %s302, 64
        %s304 = scalar_lea.vmem [#allocation5], %s303
        // Predicated region
        $region33: #{tpu_custom_call.1} parent=27 // pred_check
          %p305 = pneg %p100
        $region34: #{tpu_custom_call.1} parent=27 // pred_check_branch
          %307 = sbr.rel (%p305) target = $region36
        $region35: #{tpu_custom_call.1} parent=27 // pred_region
          %s308 = smul.u32 2, %s24
          %s310 = ssub.s32 1024, 1024
          %311 = vsyncadd %s301, %s310
          %s312 = smul.addr %s23, 8
          %s313 = sadd.s32 %s308, %s312
          %s314 = smul.addr %s313, 128
          %s315 = scalar_lea.hbm %s2, %s314
          %s316 = sshll.u32 %s304, 4
          %s317 = int_to_ptr.vmem [resolvable:$true] %s316
          %322 = dma.vmem_to_hbm [thread:$0]  %s317, 1024, %s315, %s301, 256, 256, 16
        $region36: #{tpu_custom_call.1} parent=27 // pred_fallthru
          _
      $region28: #{tpu_custom_call.1} parent=5 // pred_fallthru
        _
      %p323 = scmp.le.s32.totalorder 2, %s14
      // Predicated region
      $region37: #{tpu_custom_call.1} parent=5 // pred_check
        %p324 = pneg %p323
      $region38: #{tpu_custom_call.1} parent=5 // pred_check_branch
        %326 = sbr.rel (%p324) target = $region40
      $region39: #{tpu_custom_call.1} parent=5 // pred_region
        %s327 = ssub.s32 %s14, 2
        // Predicated region
        $region41: #{tpu_custom_call.1} parent=39 // pred_check
          %p328 = pneg %p106
        $region42: #{tpu_custom_call.1} parent=39 // pred_check_branch
          %330 = sbr.rel (%p328) target = $region44
        $region43: #{tpu_custom_call.1} parent=39 // pred_region
          %s331 = sand.u32 %s91, 1
          %s332 = scalar_lea.sflag [#allocation4], %s331
          %s333 = sand.u32 %s91, 1
          %s334 = smul.addr %s333, 64
          %s335 = scalar_lea.vmem [#allocation5], %s334
          %336 = dma.done %s332, 1024
        $region44: #{tpu_custom_call.1} parent=39 // pred_fallthru
          _
      $region40: #{tpu_custom_call.1} parent=5 // pred_fallthru
        _
    $region6: #{tpu_custom_call.1} parent=1 // loop_footer
      %s18 = sadd.s32 1, %s14
    $region7: #{tpu_custom_call.1} parent=1 // loop_footer_branch
      %13 = sbr.rel target = $region3
    $region8: #{tpu_custom_call.1} parent=1 // loop_exit
      _
    %337 = vsyncpa [#allocation3], 1
    %s338 = scalar_lea.sflag [#allocation3], 1
    %339 = vsyncpa %s338, 1
    %340 = vsyncpa [#allocation4], 1
    %s341 = scalar_lea.sflag [#allocation4], 1
    %342 = vsyncpa %s341, 1

</llo_original>
